<compile_context>
chip_gen: v6e
topology: v6e:2x2x1
jax: 0.10.0
libtpu: 0.0.40
codegen_flags: <defaults>
</compile_context>

<pallas_src>
import math
import jax
import jax.numpy as jnp
from jax.experimental import pallas as pl
from jax.experimental.pallas import tpu as pltpu

# ----------------------- configuration (small shapes) -----------------------
B = 2            # batch
S = 8            # sequence length
H = 32           # hidden size (plays the role of 768 in the real model)
NH = 2           # attention heads
HD = H // NH     # head dim
F = 64           # FFN intermediate size
VOCAB = 100
NUM_CLASSES = 4
M = (8, 16, 32)  # matryoshka (MRL) dims; each <= H
BS = B * S
C3 = NUM_CLASSES * len(M)


# --------------------------- fused forward kernel ----------------------------
def fused_kernel(x_ref, bias_ref,
                 wqkv_ref, bqkv_ref, wo_ref, bo_ref,
                 ln1_g_ref, ln1_b_ref,
                 w1_ref, b1_ref, w2_ref, b2_ref,
                 ln2_g_ref, ln2_b_ref,
                 wmrl_ref, bmrl_ref,
                 logits_ref):
    bf16 = jnp.bfloat16
    x = x_ref[...]                                   # (B*S, H) f32 embeddings

    # fused Q/K/V projection: one (B*S,H) @ (H,3H) matmul (bf16 in, f32 acc)
    qkv = jnp.dot(x.astype(bf16), wqkv_ref[...],
                  preferred_element_type=jnp.float32) + bqkv_ref[...]
    q = qkv[:, 0:H]
    k = qkv[:, H:2 * H]
    v = qkv[:, 2 * H:3 * H]

    # block-diagonal additive bias: 0 for (same batch, valid key), else -1e9.
    # Hoisted out of the head loop (loop-invariant).
    bias = bias_ref[...]                             # (B*S, B*S) f32
    scale = 1.0 / math.sqrt(HD)
    wo_w = wo_ref[...]                               # (H, H) bf16

    # multi-head attention over the whole batch slab; avoid lane-concat by
    # summing per-head output projections:
    #   concat_h(head_h) @ Wo == sum_h head_h @ Wo[h*HD:(h+1)*HD, :]
    attn = jnp.zeros((BS, H), jnp.float32)
    for h in range(NH):
        qh = q[:, h * HD:(h + 1) * HD]               # (BS, HD) f32
        kh = k[:, h * HD:(h + 1) * HD]
        vh = v[:, h * HD:(h + 1) * HD]
        sc = jnp.dot(qh, kh.T, preferred_element_type=jnp.float32) * scale + bias
        mx = jnp.max(sc, axis=-1, keepdims=True)
        p = jnp.exp(sc - mx)
        p = p * pl.reciprocal(jnp.sum(p, axis=-1, keepdims=True), approx=True)
        head = jnp.dot(p, vh, preferred_element_type=jnp.float32)   # (BS, HD)
        attn = attn + jnp.dot(head.astype(bf16), wo_w[h * HD:(h + 1) * HD, :],
                              preferred_element_type=jnp.float32)
    attn = attn + bo_ref[...]

    # residual + layernorm 1 (f32)
    h1 = x + attn
    mu = jnp.mean(h1, axis=-1, keepdims=True)
    var = jnp.mean((h1 - mu) ** 2, axis=-1, keepdims=True)
    h1 = (h1 - mu) * jax.lax.rsqrt(var + 1e-5) * ln1_g_ref[...] + ln1_b_ref[...]

    # feed-forward (bf16 matmul operands, f32 accumulation / elementwise)
    f = jnp.dot(h1.astype(bf16), w1_ref[...],
                preferred_element_type=jnp.float32) + b1_ref[...]
    f = jax.nn.gelu(f)
    f = jnp.dot(f.astype(bf16), w2_ref[...],
                preferred_element_type=jnp.float32) + b2_ref[...]

    # residual + layernorm 2 (f32)
    h2 = h1 + f
    mu2 = jnp.mean(h2, axis=-1, keepdims=True)
    var2 = jnp.mean((h2 - mu2) ** 2, axis=-1, keepdims=True)
    h2 = (h2 - mu2) * jax.lax.rsqrt(var2 + 1e-5) * ln2_g_ref[...] + ln2_b_ref[...]

    # CLS rows (row b*S of each batch element) -> single fused MRL matmul;
    # zero-padded weight rows make prefix-slicing implicit.
    cls = jnp.concatenate([h2[b * S:b * S + 1, :] for b in range(B)], axis=0)
    logits_ref[...] = jnp.dot(cls.astype(bf16), wmrl_ref[...],
                              preferred_element_type=jnp.float32) + bmrl_ref[...]


def run_fused(x2, attn_bias, wqkv, bqkv, wo, bo, g1, be1,
              w1, b1, w2, b2, g2, be2, wmrl, bmrl):
    full2d = lambda shape: pl.BlockSpec(shape, lambda i: (0, 0))
    in_specs = [
        full2d((BS, H)),            # x slab
        full2d((BS, BS)),           # additive attention bias
        full2d((H, 3 * H)), full2d((1, 3 * H)),     # fused Wqkv, bqkv
        full2d((H, H)), full2d((1, H)),             # wo, bo
        full2d((1, H)), full2d((1, H)),             # ln1 gamma, beta
        full2d((H, F)), full2d((1, F)),             # ffn w1, b1
        full2d((F, H)), full2d((1, H)),             # ffn w2, b2
        full2d((1, H)), full2d((1, H)),             # ln2 gamma, beta
        full2d((H, C3)), full2d((1, C3)),           # fused MRL weight, bias
    ]
    return pl.pallas_call(
        fused_kernel,
        out_shape=jax.ShapeDtypeStruct((B, C3), jnp.float32),
        grid_spec=pltpu.PrefetchScalarGridSpec(
            num_scalar_prefetch=0,
            grid=(1,),                               # single step, whole batch
            in_specs=in_specs,
            out_specs=full2d((B, C3)),
        ),
        compiler_params=pltpu.CompilerParams(
            dimension_semantics=("arbitrary",)),
    )(x2, attn_bias, wqkv, bqkv, wo, bo, g1, be1,
      w1, b1, w2, b2, g2, be2, wmrl, bmrl)


# --------------------------- parameter construction --------------------------
def init_params(key):
    ks = iter(jax.random.split(key, 32))
    n = lambda shape, scale=0.05: (scale * jax.random.normal(next(ks), shape)
                                   ).astype(jnp.float32)
    tok_emb = n((VOCAB, H))
    pos_emb = n((S, H))
    enc = [
        n((H, H)), jnp.zeros((1, H), jnp.float32),     # wq, bq
        n((H, H)), jnp.zeros((1, H), jnp.float32),     # wk, bk
        n((H, H)), jnp.zeros((1, H), jnp.float32),     # wv, bv
        n((H, H)), jnp.zeros((1, H), jnp.float32),     # wo, bo
        jnp.ones((1, H), jnp.float32), jnp.zeros((1, H), jnp.float32),   # ln1
        n((H, F)), jnp.zeros((1, F), jnp.float32),     # ffn w1, b1
        n((F, H)), jnp.zeros((1, H), jnp.float32),     # ffn w2, b2
        jnp.ones((1, H), jnp.float32), jnp.zeros((1, H), jnp.float32),   # ln2
    ]
    mrl = []
    for doll in M:
        mrl += [n((doll, NUM_CLASSES), 0.1), n((1, NUM_CLASSES), 0.01)]
    return tok_emb, pos_emb, enc, mrl


# ------------------------------- forward pass --------------------------------
def emotion_classifier_forward(input_ids, attention_mask,
                               tok_emb, pos_emb, enc_params, mrl_params):
    (wq, bq, wk, bk, wv, bv, wo, bo,
     g1, be1, w1, b1, w2, b2, g2, be2) = enc_params
    bf16 = jnp.bfloat16

    # glue: embedding lookup in plain JAX
    x = (tok_emb[input_ids] + pos_emb[None, :, :]).astype(jnp.float32)   # (B,S,H)
    x2 = x.reshape(BS, H)

    # block-diagonal additive attention bias (batch separation + key padding)
    mask_f = attention_mask.astype(jnp.float32)                          # (B,S)
    batch_id = jnp.repeat(jnp.arange(B), S)                              # (BS,)
    same = batch_id[:, None] == batch_id[None, :]
    key_valid = (mask_f.reshape(-1) > 0.5)[None, :]
    attn_bias = jnp.where(same & key_valid, 0.0, -1e9).astype(jnp.float32)

    # fused weights; matmul operands shipped as bf16 (halves weight DMA bytes)
    wqkv = jnp.concatenate([wq, wk, wv], axis=1).astype(bf16)            # (H,3H)
    bqkv = jnp.concatenate([bq, bk, bv], axis=1)                         # (1,3H)

    wmrl_parts, bmrl_parts = [], []
    for i, doll in enumerate(M):
        w = mrl_params[2 * i]
        wmrl_parts.append(jnp.zeros((H, NUM_CLASSES), jnp.float32).at[:doll, :].set(w))
        bmrl_parts.append(mrl_params[2 * i + 1])
    wmrl = jnp.concatenate(wmrl_parts, axis=1).astype(bf16)              # (H,3C)
    bmrl = jnp.concatenate(bmrl_parts, axis=1)                           # (1,3C)

    logits_cat = run_fused(x2, attn_bias, wqkv, bqkv,
                           wo.astype(bf16), bo, g1, be1,
                           w1.astype(bf16), b1, w2.astype(bf16), b2,
                           g2, be2, wmrl, bmrl)                          # (B,3C)
    return [logits_cat[:, i * NUM_CLASSES:(i + 1) * NUM_CLASSES]
            for i in range(len(M))]


# --------------------------- pure-JAX reference -------------------------------
def reference_forward(input_ids, attention_mask,
                      tok_emb, pos_emb, enc_params, mrl_params):
    (wq, bq, wk, bk, wv, bv, wo, bo,
     g1, be1, w1, b1, w2, b2, g2, be2) = enc_params
    bf = lambda a: a.astype(jnp.bfloat16)
    x = (tok_emb[input_ids] + pos_emb[None]).astype(jnp.float32)
    mask = attention_mask.astype(jnp.float32)
    outs = []
    for b in range(B):
        xb = x[b]
        q = jnp.dot(bf(xb), bf(wq), preferred_element_type=jnp.float32) + bq
        k = jnp.dot(bf(xb), bf(wk), preferred_element_type=jnp.float32) + bk
        v = jnp.dot(bf(xb), bf(wv), preferred_element_type=jnp.float32) + bv
        neg = (1.0 - mask[b])[None, :] * (-1e9)
        attn = jnp.zeros((S, H), jnp.float32)
        for h in range(NH):
            qs, ks, vs = (q[:, h*HD:(h+1)*HD], k[:, h*HD:(h+1)*HD],
                          v[:, h*HD:(h+1)*HD])
            sc = jnp.dot(qs, ks.T, preferred_element_type=jnp.float32) / math.sqrt(HD) + neg
            p = jax.nn.softmax(sc, axis=-1)
            head = jnp.dot(p, vs, preferred_element_type=jnp.float32)
            attn = attn + jnp.dot(bf(head), bf(wo[h*HD:(h+1)*HD, :]),
                                  preferred_element_type=jnp.float32)
        attn = attn + bo
        h1 = xb + attn
        h1 = (h1 - h1.mean(-1, keepdims=True)) * jax.lax.rsqrt(
            h1.var(-1, keepdims=True) + 1e-5) * g1 + be1
        f = jnp.dot(bf(h1), bf(w1), preferred_element_type=jnp.float32) + b1
        f = jax.nn.gelu(f)
        f = jnp.dot(bf(f), bf(w2), preferred_element_type=jnp.float32) + b2
        h2 = h1 + f
        h2 = (h2 - h2.mean(-1, keepdims=True)) * jax.lax.rsqrt(
            h2.var(-1, keepdims=True) + 1e-5) * g2 + be2
        outs.append(h2)
    hidden = jnp.stack(outs)
    cls_out = hidden[:, 0, :]
    logits = []
    for i, doll in enumerate(M):
        w, bb = mrl_params[2 * i], mrl_params[2 * i + 1]
        logits.append(jnp.dot(bf(cls_out[:, :doll]), bf(w),
                              preferred_element_type=jnp.float32) + bb)
    return logits


# ------------------------------------ main ------------------------------------
if __name__ == "__main__":
    key = jax.random.PRNGKey(0)
    k_ids, k_params = jax.random.split(key)

    input_ids = jax.random.randint(k_ids, (B, S), 0, VOCAB, dtype=jnp.int32)
    attention_mask = jnp.ones((B, S), jnp.int32).at[1, 6:].set(0)  # pad tail of row 1

    tok_emb, pos_emb, enc_params, mrl_params = init_params(k_params)

    fwd = jax.jit(emotion_classifier_forward)
    logits = fwd(input_ids, attention_mask,
                 tok_emb, pos_emb, enc_params, mrl_params)
    logits = [jax.block_until_ready(l) for l in logits]

    ref = reference_forward(input_ids, attention_mask,
                            tok_emb, pos_emb, enc_params, mrl_params)
    for got, want, doll in zip(logits, ref, M):
        assert got.shape == (B, NUM_CLASSES)
        # tolerance covers approx softmax reciprocal + bf16 matmul operands
        assert jnp.allclose(got, want, atol=2e-3, rtol=2e-3), f"mismatch for m={doll}"

    print("KERNEL_OK")
</pallas_src>

<mosaic_0001>
module attributes {stable_mosaic.version = 11 : i64} {
  func.func @fused_kernel(%arg0: i32, %arg1: memref<16x32xf32, #tpu.memory_space<vmem>>, %arg2: memref<16x16xf32, #tpu.memory_space<vmem>>, %arg3: memref<32x96xbf16, #tpu.memory_space<vmem>>, %arg4: memref<1x96xf32, #tpu.memory_space<vmem>>, %arg5: memref<32x32xbf16, #tpu.memory_space<vmem>>, %arg6: memref<1x32xf32, #tpu.memory_space<vmem>>, %arg7: memref<1x32xf32, #tpu.memory_space<vmem>>, %arg8: memref<1x32xf32, #tpu.memory_space<vmem>>, %arg9: memref<32x64xbf16, #tpu.memory_space<vmem>>, %arg10: memref<1x64xf32, #tpu.memory_space<vmem>>, %arg11: memref<64x32xbf16, #tpu.memory_space<vmem>>, %arg12: memref<1x32xf32, #tpu.memory_space<vmem>>, %arg13: memref<1x32xf32, #tpu.memory_space<vmem>>, %arg14: memref<1x32xf32, #tpu.memory_space<vmem>>, %arg15: memref<32x12xbf16, #tpu.memory_space<vmem>>, %arg16: memref<1x12xf32, #tpu.memory_space<vmem>>, %arg17: memref<2x12xf32, #tpu.memory_space<vmem>>) attributes {dimension_semantics = [#tpu.dimension_semantics<arbitrary>], iteration_bounds = array<i64: 1>, scalar_prefetch = 0 : i64, scratch_operands = 0 : i64, tpu.core_type = #tpu.core_type<tc>, window_params = [{pipeline_mode = #tpu.pipeline_mode<synchronous>, transform_indices = @transform_0, window_bounds = array<i64: 16, 32>}, {pipeline_mode = #tpu.pipeline_mode<synchronous>, transform_indices = @transform_1, window_bounds = array<i64: 16, 16>}, {pipeline_mode = #tpu.pipeline_mode<synchronous>, transform_indices = @transform_2, window_bounds = array<i64: 32, 96>}, {pipeline_mode = #tpu.pipeline_mode<synchronous>, transform_indices = @transform_3, window_bounds = array<i64: 1, 96>}, {pipeline_mode = #tpu.pipeline_mode<synchronous>, transform_indices = @transform_4, window_bounds = array<i64: 32, 32>}, {pipeline_mode = #tpu.pipeline_mode<synchronous>, transform_indices = @transform_5, window_bounds = array<i64: 1, 32>}, {pipeline_mode = #tpu.pipeline_mode<synchronous>, transform_indices = @transform_6, window_bounds = array<i64: 1, 32>}, {pipeline_mode = #tpu.pipeline_mode<synchronous>, transform_indices = @transform_7, window_bounds = array<i64: 1, 32>}, {pipeline_mode = #tpu.pipeline_mode<synchronous>, transform_indices = @transform_8, window_bounds = array<i64: 32, 64>}, {pipeline_mode = #tpu.pipeline_mode<synchronous>, transform_indices = @transform_9, window_bounds = array<i64: 1, 64>}, {pipeline_mode = #tpu.pipeline_mode<synchronous>, transform_indices = @transform_10, window_bounds = array<i64: 64, 32>}, {pipeline_mode = #tpu.pipeline_mode<synchronous>, transform_indices = @transform_11, window_bounds = array<i64: 1, 32>}, {pipeline_mode = #tpu.pipeline_mode<synchronous>, transform_indices = @transform_12, window_bounds = array<i64: 1, 32>}, {pipeline_mode = #tpu.pipeline_mode<synchronous>, transform_indices = @transform_13, window_bounds = array<i64: 1, 32>}, {pipeline_mode = #tpu.pipeline_mode<synchronous>, transform_indices = @transform_14, window_bounds = array<i64: 32, 12>}, {pipeline_mode = #tpu.pipeline_mode<synchronous>, transform_indices = @transform_15, window_bounds = array<i64: 1, 12>}, {pipeline_mode = #tpu.pipeline_mode<synchronous>, transform_indices = @transform_16, window_bounds = array<i64: 2, 12>}]} {
    %c0 = arith.constant 0 : index
    %c0_0 = arith.constant 0 : index
    %0 = vector.load %arg1[%c0, %c0_0] : memref<16x32xf32, #tpu.memory_space<vmem>>, vector<16x32xf32>
    %1 = arith.truncf %0 : vector<16x32xf32> to vector<16x32xbf16>
    %c0_1 = arith.constant 0 : index
    %c0_2 = arith.constant 0 : index
    %2 = vector.load %arg3[%c0_1, %c0_2] : memref<32x96xbf16, #tpu.memory_space<vmem>>, vector<32x96xbf16>
    %cst = arith.constant dense<0.000000e+00> : vector<16x96xf32>
    %3 = tpu.matmul %1, %2, %cst {dimension_numbers = #tpu.dot_dimension_numbers<[1], [0], [0], [1], [0, 0, 1, 1], [], []>} : vector<16x32xbf16>, vector<32x96xbf16>, vector<16x96xf32> -> vector<16x96xf32>
    %c0_3 = arith.constant 0 : index
    %c0_4 = arith.constant 0 : index
    %4 = vector.load %arg4[%c0_3, %c0_4] : memref<1x96xf32, #tpu.memory_space<vmem>>, vector<1x96xf32>
    %5 = vector.broadcast %4 : vector<1x96xf32> to vector<16x96xf32>
    %6 = arith.addf %3, %5 : vector<16x96xf32>
    %7 = vector.extract_strided_slice %6 {offsets = [0, 0], sizes = [16, 32], strides = [1, 1]} : vector<16x96xf32> to vector<16x32xf32>
    %8 = vector.extract_strided_slice %6 {offsets = [0, 32], sizes = [16, 32], strides = [1, 1]} : vector<16x96xf32> to vector<16x32xf32>
    %9 = vector.extract_strided_slice %6 {offsets = [0, 64], sizes = [16, 32], strides = [1, 1]} : vector<16x96xf32> to vector<16x32xf32>
    %c0_5 = arith.constant 0 : index
    %c0_6 = arith.constant 0 : index
    %10 = vector.load %arg2[%c0_5, %c0_6] : memref<16x16xf32, #tpu.memory_space<vmem>>, vector<16x16xf32>
    %c0_7 = arith.constant 0 : index
    %c0_8 = arith.constant 0 : index
    %11 = vector.load %arg5[%c0_7, %c0_8] : memref<32x32xbf16, #tpu.memory_space<vmem>>, vector<32x32xbf16>
    %cst_9 = arith.constant 0.000000e+00 : f32
    %12 = vector.broadcast %cst_9 : f32 to vector<16x32xf32>
    %13 = vector.extract_strided_slice %7 {offsets = [0, 0], sizes = [16, 16], strides = [1, 1]} : vector<16x32xf32> to vector<16x16xf32>
    %14 = vector.extract_strided_slice %8 {offsets = [0, 0], sizes = [16, 16], strides = [1, 1]} : vector<16x32xf32> to vector<16x16xf32>
    %15 = vector.extract_strided_slice %9 {offsets = [0, 0], sizes = [16, 16], strides = [1, 1]} : vector<16x32xf32> to vector<16x16xf32>
    %16 = tpu.transpose %14, [1, 0] : vector<16x16xf32> -> vector<16x16xf32>
    %cst_10 = arith.constant dense<0.000000e+00> : vector<16x16xf32>
    %17 = tpu.matmul %13, %16, %cst_10 {dimension_numbers = #tpu.dot_dimension_numbers<[1], [0], [0], [1], [0, 0, 1, 1], [], []>} : vector<16x16xf32>, vector<16x16xf32>, vector<16x16xf32> -> vector<16x16xf32>
    %cst_11 = arith.constant 2.500000e-01 : f32
    %18 = vector.broadcast %cst_11 : f32 to vector<16x16xf32>
    %19 = arith.mulf %17, %18 : vector<16x16xf32>
    %20 = arith.addf %19, %10 : vector<16x16xf32>
    %cst_12 = arith.constant dense<0xFF800000> : vector<16xf32>
    %21 = vector.multi_reduction <maximumf>, %20, %cst_12 [1] : vector<16x16xf32> to vector<16xf32>
    %22 = vector.shape_cast %21 : vector<16xf32> to vector<16x1xf32>
    %23 = vector.broadcast %22 : vector<16x1xf32> to vector<16x16xf32>
    %24 = arith.subf %20, %23 : vector<16x16xf32>
    %25 = math.exp %24 : vector<16x16xf32>
    %cst_13 = arith.constant dense<0.000000e+00> : vector<16xf32>
    %26 = vector.multi_reduction <add>, %25, %cst_13 [1] : vector<16x16xf32> to vector<16xf32>
    %27 = vector.shape_cast %26 : vector<16xf32> to vector<16x1xf32>
    %28 = tpu.reciprocal %27 {approx = true} : vector<16x1xf32> -> vector<16x1xf32>
    %29 = vector.broadcast %28 : vector<16x1xf32> to vector<16x16xf32>
    %30 = arith.mulf %25, %29 : vector<16x16xf32>
    %cst_14 = arith.constant dense<0.000000e+00> : vector<16x16xf32>
    %31 = tpu.matmul %30, %15, %cst_14 {dimension_numbers = #tpu.dot_dimension_numbers<[1], [0], [0], [1], [0, 0, 1, 1], [], []>} : vector<16x16xf32>, vector<16x16xf32>, vector<16x16xf32> -> vector<16x16xf32>
    %32 = arith.truncf %31 : vector<16x16xf32> to vector<16x16xbf16>
    %33 = vector.extract_strided_slice %11 {offsets = [0, 0], sizes = [16, 32], strides = [1, 1]} : vector<32x32xbf16> to vector<16x32xbf16>
    %cst_15 = arith.constant dense<0.000000e+00> : vector<16x32xf32>
    %34 = tpu.matmul %32, %33, %cst_15 {dimension_numbers = #tpu.dot_dimension_numbers<[1], [0], [0], [1], [0, 0, 1, 1], [], []>} : vector<16x16xbf16>, vector<16x32xbf16>, vector<16x32xf32> -> vector<16x32xf32>
    %35 = arith.addf %12, %34 : vector<16x32xf32>
    %36 = vector.extract_strided_slice %7 {offsets = [0, 16], sizes = [16, 16], strides = [1, 1]} : vector<16x32xf32> to vector<16x16xf32>
    %37 = vector.extract_strided_slice %8 {offsets = [0, 16], sizes = [16, 16], strides = [1, 1]} : vector<16x32xf32> to vector<16x16xf32>
    %38 = vector.extract_strided_slice %9 {offsets = [0, 16], sizes = [16, 16], strides = [1, 1]} : vector<16x32xf32> to vector<16x16xf32>
    %39 = tpu.transpose %37, [1, 0] : vector<16x16xf32> -> vector<16x16xf32>
    %cst_16 = arith.constant dense<0.000000e+00> : vector<16x16xf32>
    %40 = tpu.matmul %36, %39, %cst_16 {dimension_numbers = #tpu.dot_dimension_numbers<[1], [0], [0], [1], [0, 0, 1, 1], [], []>} : vector<16x16xf32>, vector<16x16xf32>, vector<16x16xf32> -> vector<16x16xf32>
    %cst_17 = arith.constant 2.500000e-01 : f32
    %41 = vector.broadcast %cst_17 : f32 to vector<16x16xf32>
    %42 = arith.mulf %40, %41 : vector<16x16xf32>
    %43 = arith.addf %42, %10 : vector<16x16xf32>
    %cst_18 = arith.constant dense<0xFF800000> : vector<16xf32>
    %44 = vector.multi_reduction <maximumf>, %43, %cst_18 [1] : vector<16x16xf32> to vector<16xf32>
    %45 = vector.shape_cast %44 : vector<16xf32> to vector<16x1xf32>
    %46 = vector.broadcast %45 : vector<16x1xf32> to vector<16x16xf32>
    %47 = arith.subf %43, %46 : vector<16x16xf32>
    %48 = math.exp %47 : vector<16x16xf32>
    %cst_19 = arith.constant dense<0.000000e+00> : vector<16xf32>
    %49 = vector.multi_reduction <add>, %48, %cst_19 [1] : vector<16x16xf32> to vector<16xf32>
    %50 = vector.shape_cast %49 : vector<16xf32> to vector<16x1xf32>
    %51 = tpu.reciprocal %50 {approx = true} : vector<16x1xf32> -> vector<16x1xf32>
    %52 = vector.broadcast %51 : vector<16x1xf32> to vector<16x16xf32>
    %53 = arith.mulf %48, %52 : vector<16x16xf32>
    %cst_20 = arith.constant dense<0.000000e+00> : vector<16x16xf32>
    %54 = tpu.matmul %53, %38, %cst_20 {dimension_numbers = #tpu.dot_dimension_numbers<[1], [0], [0], [1], [0, 0, 1, 1], [], []>} : vector<16x16xf32>, vector<16x16xf32>, vector<16x16xf32> -> vector<16x16xf32>
    %55 = arith.truncf %54 : vector<16x16xf32> to vector<16x16xbf16>
    %56 = vector.extract_strided_slice %11 {offsets = [16, 0], sizes = [16, 32], strides = [1, 1]} : vector<32x32xbf16> to vector<16x32xbf16>
    %cst_21 = arith.constant dense<0.000000e+00> : vector<16x32xf32>
    %57 = tpu.matmul %55, %56, %cst_21 {dimension_numbers = #tpu.dot_dimension_numbers<[1], [0], [0], [1], [0, 0, 1, 1], [], []>} : vector<16x16xbf16>, vector<16x32xbf16>, vector<16x32xf32> -> vector<16x32xf32>
    %58 = arith.addf %35, %57 : vector<16x32xf32>
    %c0_22 = arith.constant 0 : index
    %c0_23 = arith.constant 0 : index
    %59 = vector.load %arg6[%c0_22, %c0_23] : memref<1x32xf32, #tpu.memory_space<vmem>>, vector<1x32xf32>
    %60 = vector.broadcast %59 : vector<1x32xf32> to vector<16x32xf32>
    %61 = arith.addf %58, %60 : vector<16x32xf32>
    %62 = arith.addf %0, %61 : vector<16x32xf32>
    %cst_24 = arith.constant dense<0.000000e+00> : vector<16xf32>
    %63 = vector.multi_reduction <add>, %62, %cst_24 [1] : vector<16x32xf32> to vector<16xf32>
    %64 = vector.shape_cast %63 : vector<16xf32> to vector<16x1xf32>
    %cst_25 = arith.constant 3.200000e+01 : f32
    %65 = vector.broadcast %cst_25 : f32 to vector<16x1xf32>
    %66 = arith.divf %64, %65 : vector<16x1xf32>
    %67 = vector.broadcast %66 : vector<16x1xf32> to vector<16x32xf32>
    %68 = arith.subf %62, %67 : vector<16x32xf32>
    %69 = arith.mulf %68, %68 : vector<16x32xf32>
    %cst_26 = arith.constant dense<0.000000e+00> : vector<16xf32>
    %70 = vector.multi_reduction <add>, %69, %cst_26 [1] : vector<16x32xf32> to vector<16xf32>
    %71 = vector.shape_cast %70 : vector<16xf32> to vector<16x1xf32>
    %cst_27 = arith.constant 3.200000e+01 : f32
    %72 = vector.broadcast %cst_27 : f32 to vector<16x1xf32>
    %73 = arith.divf %71, %72 : vector<16x1xf32>
    %74 = vector.broadcast %66 : vector<16x1xf32> to vector<16x32xf32>
    %75 = arith.subf %62, %74 : vector<16x32xf32>
    %cst_28 = arith.constant 9.99999974E-6 : f32
    %76 = vector.broadcast %cst_28 : f32 to vector<16x1xf32>
    %77 = arith.addf %73, %76 : vector<16x1xf32>
    %78 = math.rsqrt %77 : vector<16x1xf32>
    %79 = vector.broadcast %78 : vector<16x1xf32> to vector<16x32xf32>
    %80 = arith.mulf %75, %79 : vector<16x32xf32>
    %c0_29 = arith.constant 0 : index
    %c0_30 = arith.constant 0 : index
    %81 = vector.load %arg7[%c0_29, %c0_30] : memref<1x32xf32, #tpu.memory_space<vmem>>, vector<1x32xf32>
    %82 = vector.broadcast %81 : vector<1x32xf32> to vector<16x32xf32>
    %83 = arith.mulf %80, %82 : vector<16x32xf32>
    %c0_31 = arith.constant 0 : index
    %c0_32 = arith.constant 0 : index
    %84 = vector.load %arg8[%c0_31, %c0_32] : memref<1x32xf32, #tpu.memory_space<vmem>>, vector<1x32xf32>
    %85 = vector.broadcast %84 : vector<1x32xf32> to vector<16x32xf32>
    %86 = arith.addf %83, %85 : vector<16x32xf32>
    %87 = arith.truncf %86 : vector<16x32xf32> to vector<16x32xbf16>
    %c0_33 = arith.constant 0 : index
    %c0_34 = arith.constant 0 : index
    %88 = vector.load %arg9[%c0_33, %c0_34] : memref<32x64xbf16, #tpu.memory_space<vmem>>, vector<32x64xbf16>
    %cst_35 = arith.constant dense<0.000000e+00> : vector<16x64xf32>
    %89 = tpu.matmul %87, %88, %cst_35 {dimension_numbers = #tpu.dot_dimension_numbers<[1], [0], [0], [1], [0, 0, 1, 1], [], []>} : vector<16x32xbf16>, vector<32x64xbf16>, vector<16x64xf32> -> vector<16x64xf32>
    %c0_36 = arith.constant 0 : index
    %c0_37 = arith.constant 0 : index
    %90 = vector.load %arg10[%c0_36, %c0_37] : memref<1x64xf32, #tpu.memory_space<vmem>>, vector<1x64xf32>
    %91 = vector.broadcast %90 : vector<1x64xf32> to vector<16x64xf32>
    %92 = arith.addf %89, %91 : vector<16x64xf32>
    %93 = arith.mulf %92, %92 : vector<16x64xf32>
    %94 = arith.mulf %92, %93 : vector<16x64xf32>
    %cst_38 = arith.constant 4.471500e-02 : f32
    %95 = vector.broadcast %cst_38 : f32 to vector<16x64xf32>
    %96 = arith.mulf %95, %94 : vector<16x64xf32>
    %97 = arith.addf %92, %96 : vector<16x64xf32>
    %cst_39 = arith.constant 0.797884583 : f32
    %98 = vector.broadcast %cst_39 : f32 to vector<16x64xf32>
    %99 = arith.mulf %98, %97 : vector<16x64xf32>
    %100 = math.tanh %99 : vector<16x64xf32>
    %cst_40 = arith.constant 1.000000e+00 : f32
    %101 = vector.broadcast %cst_40 : f32 to vector<16x64xf32>
    %102 = arith.addf %101, %100 : vector<16x64xf32>
    %cst_41 = arith.constant 5.000000e-01 : f32
    %103 = vector.broadcast %cst_41 : f32 to vector<16x64xf32>
    %104 = arith.mulf %103, %102 : vector<16x64xf32>
    %105 = arith.mulf %92, %104 : vector<16x64xf32>
    %106 = arith.truncf %105 : vector<16x64xf32> to vector<16x64xbf16>
    %c0_42 = arith.constant 0 : index
    %c0_43 = arith.constant 0 : index
    %107 = vector.load %arg11[%c0_42, %c0_43] : memref<64x32xbf16, #tpu.memory_space<vmem>>, vector<64x32xbf16>
    %cst_44 = arith.constant dense<0.000000e+00> : vector<16x32xf32>
    %108 = tpu.matmul %106, %107, %cst_44 {dimension_numbers = #tpu.dot_dimension_numbers<[1], [0], [0], [1], [0, 0, 1, 1], [], []>} : vector<16x64xbf16>, vector<64x32xbf16>, vector<16x32xf32> -> vector<16x32xf32>
    %c0_45 = arith.constant 0 : index
    %c0_46 = arith.constant 0 : index
    %109 = vector.load %arg12[%c0_45, %c0_46] : memref<1x32xf32, #tpu.memory_space<vmem>>, vector<1x32xf32>
    %110 = vector.broadcast %109 : vector<1x32xf32> to vector<16x32xf32>
    %111 = arith.addf %108, %110 : vector<16x32xf32>
    %112 = arith.addf %86, %111 : vector<16x32xf32>
    %cst_47 = arith.constant dense<0.000000e+00> : vector<16xf32>
    %113 = vector.multi_reduction <add>, %112, %cst_47 [1] : vector<16x32xf32> to vector<16xf32>
    %114 = vector.shape_cast %113 : vector<16xf32> to vector<16x1xf32>
    %cst_48 = arith.constant 3.200000e+01 : f32
    %115 = vector.broadcast %cst_48 : f32 to vector<16x1xf32>
    %116 = arith.divf %114, %115 : vector<16x1xf32>
    %117 = vector.broadcast %116 : vector<16x1xf32> to vector<16x32xf32>
    %118 = arith.subf %112, %117 : vector<16x32xf32>
    %119 = arith.mulf %118, %118 : vector<16x32xf32>
    %cst_49 = arith.constant dense<0.000000e+00> : vector<16xf32>
    %120 = vector.multi_reduction <add>, %119, %cst_49 [1] : vector<16x32xf32> to vector<16xf32>
    %121 = vector.shape_cast %120 : vector<16xf32> to vector<16x1xf32>
    %cst_50 = arith.constant 3.200000e+01 : f32
    %122 = vector.broadcast %cst_50 : f32 to vector<16x1xf32>
    %123 = arith.divf %121, %122 : vector<16x1xf32>
    %124 = vector.broadcast %116 : vector<16x1xf32> to vector<16x32xf32>
    %125 = arith.subf %112, %124 : vector<16x32xf32>
    %cst_51 = arith.constant 9.99999974E-6 : f32
    %126 = vector.broadcast %cst_51 : f32 to vector<16x1xf32>
    %127 = arith.addf %123, %126 : vector<16x1xf32>
    %128 = math.rsqrt %127 : vector<16x1xf32>
    %129 = vector.broadcast %128 : vector<16x1xf32> to vector<16x32xf32>
    %130 = arith.mulf %125, %129 : vector<16x32xf32>
    %c0_52 = arith.constant 0 : index
    %c0_53 = arith.constant 0 : index
    %131 = vector.load %arg13[%c0_52, %c0_53] : memref<1x32xf32, #tpu.memory_space<vmem>>, vector<1x32xf32>
    %132 = vector.broadcast %131 : vector<1x32xf32> to vector<16x32xf32>
    %133 = arith.mulf %130, %132 : vector<16x32xf32>
    %c0_54 = arith.constant 0 : index
    %c0_55 = arith.constant 0 : index
    %134 = vector.load %arg14[%c0_54, %c0_55] : memref<1x32xf32, #tpu.memory_space<vmem>>, vector<1x32xf32>
    %135 = vector.broadcast %134 : vector<1x32xf32> to vector<16x32xf32>
    %136 = arith.addf %133, %135 : vector<16x32xf32>
    %137 = vector.extract_strided_slice %136 {offsets = [0, 0], sizes = [1, 32], strides = [1, 1]} : vector<16x32xf32> to vector<1x32xf32>
    %138 = vector.extract_strided_slice %136 {offsets = [8, 0], sizes = [1, 32], strides = [1, 1]} : vector<16x32xf32> to vector<1x32xf32>
    %139 = tpu.concatenate %137, %138 in 0 : vector<1x32xf32>, vector<1x32xf32> -> vector<2x32xf32>
    %140 = arith.truncf %139 : vector<2x32xf32> to vector<2x32xbf16>
    %c0_56 = arith.constant 0 : index
    %c0_57 = arith.constant 0 : index
    %141 = vector.load %arg15[%c0_56, %c0_57] : memref<32x12xbf16, #tpu.memory_space<vmem>>, vector<32x12xbf16>
    %cst_58 = arith.constant dense<0.000000e+00> : vector<2x12xf32>
    %142 = tpu.matmul %140, %141, %cst_58 {dimension_numbers = #tpu.dot_dimension_numbers<[1], [0], [0], [1], [0, 0, 1, 1], [], []>} : vector<2x32xbf16>, vector<32x12xbf16>, vector<2x12xf32> -> vector<2x12xf32>
    %c0_59 = arith.constant 0 : index
    %c0_60 = arith.constant 0 : index
    %143 = vector.load %arg16[%c0_59, %c0_60] : memref<1x12xf32, #tpu.memory_space<vmem>>, vector<1x12xf32>
    %144 = vector.broadcast %143 : vector<1x12xf32> to vector<2x12xf32>
    %145 = arith.addf %142, %144 : vector<2x12xf32>
    %c0_61 = arith.constant 0 : index
    %c0_62 = arith.constant 0 : index
    %146 = vector.load %arg17[%c0_61, %c0_62] : memref<2x12xf32, #tpu.memory_space<vmem>>, vector<2x12xf32>
    tpu.vector_store %arg17[%c0_61, %c0_62], %145 {strides = array<i32>} : memref<2x12xf32, #tpu.memory_space<vmem>>, vector<2x12xf32>,
    return
  }
  func.func @transform_0(%arg0: i32) -> (i32, i32) {
    %c0_i32 = arith.constant 0 : i32
    %c0_i32_0 = arith.constant 0 : i32
    %c0_i32_1 = arith.constant 0 : i32
    return %c0_i32, %c0_i32_0 : i32, i32
  }
  func.func @transform_1(%arg0: i32) -> (i32, i32) {
    %c0_i32 = arith.constant 0 : i32
    %c0_i32_0 = arith.constant 0 : i32
    %c0_i32_1 = arith.constant 0 : i32
    return %c0_i32, %c0_i32_0 : i32, i32
  }
  func.func @transform_2(%arg0: i32) -> (i32, i32) {
    %c0_i32 = arith.constant 0 : i32
    %c0_i32_0 = arith.constant 0 : i32
    %c0_i32_1 = arith.constant 0 : i32
    return %c0_i32, %c0_i32_0 : i32, i32
  }
  func.func @transform_3(%arg0: i32) -> (i32, i32) {
    %c0_i32 = arith.constant 0 : i32
    %c0_i32_0 = arith.constant 0 : i32
    %c0_i32_1 = arith.constant 0 : i32
    return %c0_i32, %c0_i32_0 : i32, i32
  }
  func.func @transform_4(%arg0: i32) -> (i32, i32) {
    %c0_i32 = arith.constant 0 : i32
    %c0_i32_0 = arith.constant 0 : i32
    %c0_i32_1 = arith.constant 0 : i32
    return %c0_i32, %c0_i32_0 : i32, i32
  }
  func.func @transform_5(%arg0: i32) -> (i32, i32) {
    %c0_i32 = arith.constant 0 : i32
    %c0_i32_0 = arith.constant 0 : i32
    %c0_i32_1 = arith.constant 0 : i32
    return %c0_i32, %c0_i32_0 : i32, i32
  }
  func.func @transform_6(%arg0: i32) -> (i32, i32) {
    %c0_i32 = arith.constant 0 : i32
    %c0_i32_0 = arith.constant 0 : i32
    %c0_i32_1 = arith.constant 0 : i32
    return %c0_i32, %c0_i32_0 : i32, i32
  }
  func.func @transform_7(%arg0: i32) -> (i32, i32) {
    %c0_i32 = arith.constant 0 : i32
    %c0_i32_0 = arith.constant 0 : i32
    %c0_i32_1 = arith.constant 0 : i32
    return %c0_i32, %c0_i32_0 : i32, i32
  }
  func.func @transform_8(%arg0: i32) -> (i32, i32) {
    %c0_i32 = arith.constant 0 : i32
    %c0_i32_0 = arith.constant 0 : i32
    %c0_i32_1 = arith.constant 0 : i32
    return %c0_i32, %c0_i32_0 : i32, i32
  }
  func.func @transform_9(%arg0: i32) -> (i32, i32) {
    %c0_i32 = arith.constant 0 : i32
    %c0_i32_0 = arith.constant 0 : i32
    %c0_i32_1 = arith.constant 0 : i32
    return %c0_i32, %c0_i32_0 : i32, i32
  }
  func.func @transform_10(%arg0: i32) -> (i32, i32) {
    %c0_i32 = arith.constant 0 : i32
    %c0_i32_0 = arith.constant 0 : i32
    %c0_i32_1 = arith.constant 0 : i32
    return %c0_i32, %c0_i32_0 : i32, i32
  }
  func.func @transform_11(%arg0: i32) -> (i32, i32) {
    %c0_i32 = arith.constant 0 : i32
    %c0_i32_0 = arith.constant 0 : i32
    %c0_i32_1 = arith.constant 0 : i32
    return %c0_i32, %c0_i32_0 : i32, i32
  }
  func.func @transform_12(%arg0: i32) -> (i32, i32) {
    %c0_i32 = arith.constant 0 : i32
    %c0_i32_0 = arith.constant 0 : i32
    %c0_i32_1 = arith.constant 0 : i32
    return %c0_i32, %c0_i32_0 : i32, i32
  }
  func.func @transform_13(%arg0: i32) -> (i32, i32) {
    %c0_i32 = arith.constant 0 : i32
    %c0_i32_0 = arith.constant 0 : i32
    %c0_i32_1 = arith.constant 0 : i32
    return %c0_i32, %c0_i32_0 : i32, i32
  }
  func.func @transform_14(%arg0: i32) -> (i32, i32) {
    %c0_i32 = arith.constant 0 : i32
    %c0_i32_0 = arith.constant 0 : i32
    %c0_i32_1 = arith.constant 0 : i32
    return %c0_i32, %c0_i32_0 : i32, i32
  }
  func.func @transform_15(%arg0: i32) -> (i32, i32) {
    %c0_i32 = arith.constant 0 : i32
    %c0_i32_0 = arith.constant 0 : i32
    %c0_i32_1 = arith.constant 0 : i32
    return %c0_i32, %c0_i32_0 : i32, i32
  }
  func.func @transform_16(%arg0: i32) -> (i32, i32) {
    %c0_i32 = arith.constant 0 : i32
    %c0_i32_0 = arith.constant 0 : i32
    %c0_i32_1 = arith.constant 0 : i32
    return %c0_i32, %c0_i32_0 : i32, i32
  }
}

</mosaic_0001>

<llo_original>
// kernel: emotion_classifier_forward.1
$region0: #{emotion_classifier_forward.1}
  #allocation0 [shape = 'u32[]', space=smem, size = 0x4, offset = 0x4, fixed_abs, tag = 'smem constant byte address 0x4 - core index']
  #allocation1 [shape = 'u32[144,128]{1,0:T(1,128)}', space=vmem, size = 0x12000, scoped, tag = 'internal scratch']
  %s0 = inlined_call_operand.vmem [shape: f32[16,32], index: 0, kind: input, shape index: {}]
  %s1 = inlined_call_operand.vmem [shape: f32[16,16], index: 1, kind: input, shape index: {}]
  %s2 = inlined_call_operand.vmem [shape: bf16[32,96], index: 2, kind: input, shape index: {}]
  %s3 = inlined_call_operand.vmem [shape: f32[1,96], index: 3, kind: input, shape index: {}]
  %s4 = inlined_call_operand.vmem [shape: bf16[32,32], index: 4, kind: input, shape index: {}]
  %s5 = inlined_call_operand.vmem [shape: f32[1,32], index: 5, kind: input, shape index: {}]
  %s6 = inlined_call_operand.vmem [shape: f32[1,32], index: 6, kind: input, shape index: {}]
  %s7 = inlined_call_operand.vmem [shape: f32[1,32], index: 7, kind: input, shape index: {}]
  %s8 = inlined_call_operand.vmem [shape: bf16[32,64], index: 8, kind: input, shape index: {}]
  %s9 = inlined_call_operand.vmem [shape: f32[1,64], index: 9, kind: input, shape index: {}]
  %s10 = inlined_call_operand.vmem [shape: bf16[64,32], index: 10, kind: input, shape index: {}]
  %s11 = inlined_call_operand.vmem [shape: f32[1,32], index: 11, kind: input, shape index: {}]
  %s12 = inlined_call_operand.vmem [shape: f32[1,32], index: 12, kind: input, shape index: {}]
  %s13 = inlined_call_operand.vmem [shape: f32[1,32], index: 13, kind: input, shape index: {}]
  %s14 = inlined_call_operand.vmem [shape: bf16[32,12], index: 14, kind: input, shape index: {}]
  %s15 = inlined_call_operand.vmem [shape: f32[1,12], index: 15, kind: input, shape index: {}]
  %s16 = inlined_call_operand.vmem [shape: f32[2,12], index: 16, kind: output, shape index: {}]
  %s17 = sld [smem:[#allocation0]]
  $region74: #{emotion_classifier_forward.1} parent=0
    _
  %s19 = ssub.s32 1, %s17
  %s20 = scalar_select 0, %s19, %s17
  // Predicated region
  $region2: #{emotion_classifier_forward.1} parent=0 // pred_check
    _
  $region3: #{emotion_classifier_forward.1} parent=0 // pred_check_branch
    %22 = sbr.rel (0) target = $region5
  $region4: #{emotion_classifier_forward.1} parent=0 // pred_region
    _
  $region5: #{emotion_classifier_forward.1} parent=0 // pred_fallthru
    _
  // Predicated region
  $region6: #{emotion_classifier_forward.1} parent=0 // pred_check
    _
  $region7: #{emotion_classifier_forward.1} parent=0 // pred_check_branch
    %24 = sbr.rel (0) target = $region9
  $region8: #{emotion_classifier_forward.1} parent=0 // pred_region
    _
  $region9: #{emotion_classifier_forward.1} parent=0 // pred_fallthru
    _
  // Predicated region
  $region10: #{emotion_classifier_forward.1} parent=0 // pred_check
    _
  $region11: #{emotion_classifier_forward.1} parent=0 // pred_check_branch
    %26 = sbr.rel (0) target = $region13
  $region12: #{emotion_classifier_forward.1} parent=0 // pred_region
    _
  $region13: #{emotion_classifier_forward.1} parent=0 // pred_fallthru
    _
  // Predicated region
  $region14: #{emotion_classifier_forward.1} parent=0 // pred_check
    _
  $region15: #{emotion_classifier_forward.1} parent=0 // pred_check_branch
    %28 = sbr.rel (0) target = $region17
  $region16: #{emotion_classifier_forward.1} parent=0 // pred_region
    _
  $region17: #{emotion_classifier_forward.1} parent=0 // pred_fallthru
    _
  // Predicated region
  $region18: #{emotion_classifier_forward.1} parent=0 // pred_check
    _
  $region19: #{emotion_classifier_forward.1} parent=0 // pred_check_branch
    %30 = sbr.rel (0) target = $region21
  $region20: #{emotion_classifier_forward.1} parent=0 // pred_region
    _
  $region21: #{emotion_classifier_forward.1} parent=0 // pred_fallthru
    _
  // Predicated region
  $region22: #{emotion_classifier_forward.1} parent=0 // pred_check
    _
  $region23: #{emotion_classifier_forward.1} parent=0 // pred_check_branch
    %32 = sbr.rel (0) target = $region25
  $region24: #{emotion_classifier_forward.1} parent=0 // pred_region
    _
  $region25: #{emotion_classifier_forward.1} parent=0 // pred_fallthru
    _
  // Predicated region
  $region26: #{emotion_classifier_forward.1} parent=0 // pred_check
    _
  $region27: #{emotion_classifier_forward.1} parent=0 // pred_check_branch
    %34 = sbr.rel (0) target = $region29
  $region28: #{emotion_classifier_forward.1} parent=0 // pred_region
    _
  $region29: #{emotion_classifier_forward.1} parent=0 // pred_fallthru
    _
  // Predicated region
  $region30: #{emotion_classifier_forward.1} parent=0 // pred_check
    _
  $region31: #{emotion_classifier_forward.1} parent=0 // pred_check_branch
    %36 = sbr.rel (0) target = $region33
  $region32: #{emotion_classifier_forward.1} parent=0 // pred_region
    _
  $region33: #{emotion_classifier_forward.1} parent=0 // pred_fallthru
    _
  // Predicated region
  $region34: #{emotion_classifier_forward.1} parent=0 // pred_check
    _
  $region35: #{emotion_classifier_forward.1} parent=0 // pred_check_branch
    %38 = sbr.rel (0) target = $region37
  $region36: #{emotion_classifier_forward.1} parent=0 // pred_region
    _
  $region37: #{emotion_classifier_forward.1} parent=0 // pred_fallthru
    _
  // Predicated region
  $region38: #{emotion_classifier_forward.1} parent=0 // pred_check
    _
  $region39: #{emotion_classifier_forward.1} parent=0 // pred_check_branch
    %40 = sbr.rel (0) target = $region41
  $region40: #{emotion_classifier_forward.1} parent=0 // pred_region
    _
  $region41: #{emotion_classifier_forward.1} parent=0 // pred_fallthru
    _
  // Predicated region
  $region42: #{emotion_classifier_forward.1} parent=0 // pred_check
    _
  $region43: #{emotion_classifier_forward.1} parent=0 // pred_check_branch
    %42 = sbr.rel (0) target = $region45
  $region44: #{emotion_classifier_forward.1} parent=0 // pred_region
    _
  $region45: #{emotion_classifier_forward.1} parent=0 // pred_fallthru
    _
  // Predicated region
  $region46: #{emotion_classifier_forward.1} parent=0 // pred_check
    _
  $region47: #{emotion_classifier_forward.1} parent=0 // pred_check_branch
    %44 = sbr.rel (0) target = $region49
  $region48: #{emotion_classifier_forward.1} parent=0 // pred_region
    _
  $region49: #{emotion_classifier_forward.1} parent=0 // pred_fallthru
    _
  // Predicated region
  $region50: #{emotion_classifier_forward.1} parent=0 // pred_check
    _
  $region51: #{emotion_classifier_forward.1} parent=0 // pred_check_branch
    %46 = sbr.rel (0) target = $region53
  $region52: #{emotion_classifier_forward.1} parent=0 // pred_region
    _
  $region53: #{emotion_classifier_forward.1} parent=0 // pred_fallthru
    _
  // Predicated region
  $region54: #{emotion_classifier_forward.1} parent=0 // pred_check
    _
  $region55: #{emotion_classifier_forward.1} parent=0 // pred_check_branch
    %48 = sbr.rel (0) target = $region57
  $region56: #{emotion_classifier_forward.1} parent=0 // pred_region
    _
  $region57: #{emotion_classifier_forward.1} parent=0 // pred_fallthru
    _
  // Predicated region
  $region58: #{emotion_classifier_forward.1} parent=0 // pred_check
    _
  $region59: #{emotion_classifier_forward.1} parent=0 // pred_check_branch
    %50 = sbr.rel (0) target = $region61
  $region60: #{emotion_classifier_forward.1} parent=0 // pred_region
    _
  $region61: #{emotion_classifier_forward.1} parent=0 // pred_fallthru
    _
  // Predicated region
  $region62: #{emotion_classifier_forward.1} parent=0 // pred_check
    _
  $region63: #{emotion_classifier_forward.1} parent=0 // pred_check_branch
    %52 = sbr.rel (0) target = $region65
  $region64: #{emotion_classifier_forward.1} parent=0 // pred_region
    _
  $region65: #{emotion_classifier_forward.1} parent=0 // pred_fallthru
    _
  %v54 = vld [vmem:[%s0] sm:$0xff]
  %v55 = vld [vmem:[%s0 + $0x8] sm:$0xff]
  %v56 = vpack.c.bf16 %v55, %v54
  %v57 = vld [vmem:[%s2] sm:$0xf]
  %v58 = vld [vmem:[%s2 + $0x4] sm:$0xf]
  %v59 = vld [vmem:[%s2 + $0x8] sm:$0xf]
  %v60 = vld [vmem:[%s2 + $0xc] sm:$0xf]
  %v61 = vld [vmem:[%s3] sm:$0x1]
  %v63 = vlaneseq
  %v64 = vshrl.u32 %v63, 7
  %v65 = vsub.s32 0, %v64
  %v66 = vrot.slane %v61, %v65
  %v72 = vunpack.c.l.b16 %v57
  %v73 = vunpack.c.l.b16 %v58
  %v74 = vunpack.c.l.b16 %v59
  %v75 = vunpack.c.l.b16 %v60
  %v76 = vpack.c.b16 %v73, %v72
  %v77 = vpack.c.b16 %v75, %v74
  %vm80 = vcmask 261120
  %v82 = vsel %vm80, %v56, 0
  %84 = vmatprep.subr.bf16.mxu0 0
  %85 = vmatpush1.bf16.msra.mxu0 0
  %86 = vmatprep.subr.bf16.mxu0 0
  %87 = vmatpush1.bf16.msra.mxu0 0
  %88 = vmatprep.subr.bf16.mxu0 0
  %89 = vmatpush1.bf16.msra.mxu0 0
  %90 = vmatprep.subr.bf16.mxu0 0
  %91 = vmatpush1.bf16.msra.mxu0 0
  %92 = vmatprep.subr.bf16.mxu0 0
  %93 = vmatpush1.bf16.msra.mxu0 0
  %94 = vmatprep.subr.bf16.mxu0 0
  %95 = vmatpush1.bf16.msra.mxu0 0
  %96 = vmatprep.subr.bf16.mxu0 0
  %97 = vmatpush1.bf16.msra.mxu0 %v77
  %98 = vmatprep.subr.bf16.mxu0 0
  %99 = vmatpush1.bf16.msra.mxu0 %v76
  %100 = vmatprep.subr.bf16.mxu0 0
  %101 = vmatpush2.bf16.msra.mxu0 0
  %102 = vmatprep.subr.bf16.mxu0 0
  %103 = vmatpush2.bf16.msra.mxu0 0
  %104 = vmatprep.subr.bf16.mxu0 0
  %105 = vmatpush2.bf16.msra.mxu0 0
  %106 = vmatprep.subr.bf16.mxu0 0
  %107 = vmatpush2.bf16.msra.mxu0 0
  %108 = vmatprep.subr.bf16.mxu0 0
  %109 = vmatpush2.bf16.msra.mxu0 0
  %110 = vmatprep.subr.bf16.mxu0 0
  %111 = vmatpush2.bf16.msra.mxu0 0
  %112 = vmatprep.subr.bf16.mxu0 0
  %113 = vmatpush2.bf16.msra.mxu0 0
  %114 = vmatprep.subr.bf16.mxu0 0
  %115 = vmatpush2.bf16.msra.mxu0 0
  %116 = vmatprep.mubr.bf16.mxu0 0
  %117 = vmatmul.mubr.bf16.gmra.mxu0 %v82
  %v118 = vpop.f32.mrf.mxu0
  %v119 = vadd.f32 %v66, %v118
  %v120 = vpop.f32.mrf.mxu0
  %v121 = vpop.f32.mrf.mxu0
  %v122 = vadd.f32 %v66, %v121
  %v123 = vpop.f32.mrf.mxu0
  %124 = vdwg.mxu0
  %v125 = vld [vmem:[%s1] sm:$0xff]
  %v126 = vld [vmem:[%s1 + $0x8] sm:$0xff]
  %v127 = vld [vmem:[%s4] sm:$0xf]
  %v128 = vld [vmem:[%s4 + $0x4] sm:$0xf]
  %v129 = vld [vmem:[%s4 + $0x8] sm:$0xf]
  %v130 = vld [vmem:[%s4 + $0xc] sm:$0xf]
  %133 = vrot.lane.b32.xlu0 %v119, 96
  %v134 = vpop.permute.xlu0 %133
  %135 = vrot.lane.b32.xlu0 %v122, 96
  %v136 = vpop.permute.xlu0 %135
  %vm137 = vcmask 130048
  %v138 = vsel %vm137, %v119, 0
  %v140 = vsel %vm137, %v122, 0
  %v142 = vsel %vm137, %v134, 0
  %v144 = vsel %vm137, %v136, 0
  %146 = vmatprep.subr.mxu0 0.0
  %147 = vmatpush1.xpose.msra.mxu0 0.0
  %148 = vmatprep.subr.mxu0 0.0
  %149 = vmatpush1.xpose.msra.mxu0 0.0
  %150 = vmatprep.subr.mxu0 0.0
  %151 = vmatpush1.xpose.msra.mxu0 0.0
  %152 = vmatprep.subr.mxu0 0.0
  %153 = vmatpush1.xpose.msra.mxu0 0.0
  %154 = vmatprep.subr.mxu0 0.0
  %155 = vmatpush1.xpose.msra.mxu0 0.0
  %156 = vmatprep.subr.mxu0 0.0
  %157 = vmatpush1.xpose.msra.mxu0 0.0
  %158 = vmatprep.subr.mxu0 0.0
  %159 = vmatpush1.xpose.msra.mxu0 0.0
  %160 = vmatprep.subr.mxu0 0.0
  %161 = vmatpush1.xpose.msra.mxu0 0.0
  %162 = vmatprep.subr.mxu0 0.0
  %163 = vmatpush1.xpose.msra.mxu0 0.0
  %164 = vmatprep.subr.mxu0 0.0
  %165 = vmatpush1.xpose.msra.mxu0 0.0
  %166 = vmatprep.subr.mxu0 0.0
  %167 = vmatpush1.xpose.msra.mxu0 0.0
  %168 = vmatprep.subr.mxu0 0.0
  %169 = vmatpush1.xpose.msra.mxu0 0.0
  %170 = vmatprep.subr.mxu0 0.0
  %171 = vmatpush1.xpose.msra.mxu0 0.0
  %172 = vmatprep.subr.mxu0 0.0
  %173 = vmatpush1.xpose.msra.mxu0 0.0
  %174 = vmatprep.subr.mxu0 0.0
  %175 = vmatpush1.xpose.msra.mxu0 %v144
  %176 = vmatprep.subr.mxu0 0.0
  %177 = vmatpush1.xpose.msra.mxu0 %v142
  %178 = vmatprep.subr.mxu0 0.0
  %179 = vmatpush2.xpose.msra.mxu0 0.0
  %180 = vmatprep.subr.mxu0 0.0
  %181 = vmatpush2.xpose.msra.mxu0 0.0
  %182 = vmatprep.subr.mxu0 0.0
  %183 = vmatpush2.xpose.msra.mxu0 0.0
  %184 = vmatprep.subr.mxu0 0.0
  %185 = vmatpush2.xpose.msra.mxu0 0.0
  %186 = vmatprep.subr.mxu0 0.0
  %187 = vmatpush2.xpose.msra.mxu0 0.0
  %188 = vmatprep.subr.mxu0 0.0
  %189 = vmatpush2.xpose.msra.mxu0 0.0
  %190 = vmatprep.subr.mxu0 0.0
  %191 = vmatpush2.xpose.msra.mxu0 0.0
  %192 = vmatprep.subr.mxu0 0.0
  %193 = vmatpush2.xpose.msra.mxu0 0.0
  %194 = vmatprep.subr.mxu0 0.0
  %195 = vmatpush2.xpose.msra.mxu0 0.0
  %196 = vmatprep.subr.mxu0 0.0
  %197 = vmatpush2.xpose.msra.mxu0 0.0
  %198 = vmatprep.subr.mxu0 0.0
  %199 = vmatpush2.xpose.msra.mxu0 0.0
  %200 = vmatprep.subr.mxu0 0.0
  %201 = vmatpush2.xpose.msra.mxu0 0.0
  %202 = vmatprep.subr.mxu0 0.0
  %203 = vmatpush2.xpose.msra.mxu0 0.0
  %204 = vmatprep.subr.mxu0 0.0
  %205 = vmatpush2.xpose.msra.mxu0 0.0
  %206 = vmatprep.subr.mxu0 0.0
  %207 = vmatpush2.xpose.msra.mxu0 0.0
  %208 = vmatprep.subr.mxu0 0.0
  %209 = vmatpush2.xpose.msra.mxu0 0.0
  %210 = vmatprep.mubr.f32.mxu0 0.0
  %211 = vmatmul.mubr.f32.gmra.mxu0 %v138
  %v212 = vpop.f32.mrf.mxu0
  %v213 = vadd.f32 0.0, %v212
  %v214 = vpop.f32.mrf.mxu0
  %215 = vmatprep.mubr.f32.mxu0 0.0
  %216 = vmatmul.mubr.f32.gmra.mxu0 %v140
  %v217 = vpop.f32.mrf.mxu0
  %v218 = vadd.f32 0.0, %v217
  %v219 = vpop.f32.mrf.mxu0
  %220 = vdwg.mxu0
  %v221 = vmul.f32 %v213, 0.25
  %v222 = vmul.f32 %v218, 0.25
  %v223 = vadd.f32 %v221, %v125
  %v224 = vadd.f32 %v222, %v126
  %v225 = vsel %vm137, %v223, -inf
  %226 = vmax.xlane.f32.xlu0 %v225
  %v227 = vpop.xlane.xlu0 %226
  %v228 = vsel %vm137, %v224, -inf
  %229 = vmax.xlane.f32.xlu0 %v228
  %v230 = vpop.xlane.xlu0 %229
  %v231 = vsub.f32 %v223, %v227
  %v232 = vsub.f32 %v224, %v230
  %v233 = vmul.f32 %v231, 1.442695
  %v234 = vpow.pop %v233
  %v235 = vmul.f32 %v232, 1.442695
  %v236 = vpow.pop %v235
  %v237 = vsel %vm137, %v234, 0.0
  %238 = vadd.xlane.f32.xlu0 %v237
  %v239 = vpop.xlane.xlu0 %238
  %v240 = vsel %vm137, %v236, 0.0
  %241 = vadd.xlane.f32.xlu0 %v240
  %v242 = vpop.xlane.xlu0 %241
  %v243 = vrcp.pop %v239
  %v244 = vrcp.pop %v242
  %v245 = vmul.f32 %v234, %v243
  %v246 = vmul.f32 %v236, %v244
  %247 = vrot.lane.b32.xlu0 %v119, 64
  %v248 = vpop.permute.xlu0 %247
  %249 = vrot.lane.b32.xlu0 %v122, 64
  %v250 = vpop.permute.xlu0 %249
  %v254 = vsel %vm137, %v245, 0
  %v257 = vsel %vm137, %v246, 0
  %259 = vmatprep.subr.mxu0 0.0
  %260 = vmatpush1.msra.mxu0 0.0
  %261 = vmatprep.subr.mxu0 0.0
  %262 = vmatpush1.msra.mxu0 0.0
  %263 = vmatprep.subr.mxu0 0.0
  %264 = vmatpush1.msra.mxu0 0.0
  %265 = vmatprep.subr.mxu0 0.0
  %266 = vmatpush1.msra.mxu0 0.0
  %267 = vmatprep.subr.mxu0 0.0
  %268 = vmatpush1.msra.mxu0 0.0
  %269 = vmatprep.subr.mxu0 0.0
  %270 = vmatpush1.msra.mxu0 0.0
  %271 = vmatprep.subr.mxu0 0.0
  %272 = vmatpush1.msra.mxu0 0.0
  %273 = vmatprep.subr.mxu0 0.0
  %274 = vmatpush1.msra.mxu0 0.0
  %275 = vmatprep.subr.mxu0 0.0
  %276 = vmatpush1.msra.mxu0 0.0
  %277 = vmatprep.subr.mxu0 0.0
  %278 = vmatpush1.msra.mxu0 0.0
  %279 = vmatprep.subr.mxu0 0.0
  %280 = vmatpush1.msra.mxu0 0.0
  %281 = vmatprep.subr.mxu0 0.0
  %282 = vmatpush1.msra.mxu0 0.0
  %283 = vmatprep.subr.mxu0 0.0
  %284 = vmatpush1.msra.mxu0 0.0
  %285 = vmatprep.subr.mxu0 0.0
  %286 = vmatpush1.msra.mxu0 0.0
  %287 = vmatprep.subr.mxu0 0.0
  %288 = vmatpush1.msra.mxu0 %v250
  %289 = vmatprep.subr.mxu0 0.0
  %290 = vmatpush1.msra.mxu0 %v248
  %291 = vmatprep.subr.mxu0 0.0
  %292 = vmatpush2.msra.mxu0 0.0
  %293 = vmatprep.subr.mxu0 0.0
  %294 = vmatpush2.msra.mxu0 0.0
  %295 = vmatprep.subr.mxu0 0.0
  %296 = vmatpush2.msra.mxu0 0.0
  %297 = vmatprep.subr.mxu0 0.0
  %298 = vmatpush2.msra.mxu0 0.0
  %299 = vmatprep.subr.mxu0 0.0
  %300 = vmatpush2.msra.mxu0 0.0
  %301 = vmatprep.subr.mxu0 0.0
  %302 = vmatpush2.msra.mxu0 0.0
  %303 = vmatprep.subr.mxu0 0.0
  %304 = vmatpush2.msra.mxu0 0.0
  %305 = vmatprep.subr.mxu0 0.0
  %306 = vmatpush2.msra.mxu0 0.0
  %307 = vmatprep.subr.mxu0 0.0
  %308 = vmatpush2.msra.mxu0 0.0
  %309 = vmatprep.subr.mxu0 0.0
  %310 = vmatpush2.msra.mxu0 0.0
  %311 = vmatprep.subr.mxu0 0.0
  %312 = vmatpush2.msra.mxu0 0.0
  %313 = vmatprep.subr.mxu0 0.0
  %314 = vmatpush2.msra.mxu0 0.0
  %315 = vmatprep.subr.mxu0 0.0
  %316 = vmatpush2.msra.mxu0 0.0
  %317 = vmatprep.subr.mxu0 0.0
  %318 = vmatpush2.msra.mxu0 0.0
  %319 = vmatprep.subr.mxu0 0.0
  %320 = vmatpush2.msra.mxu0 0.0
  %321 = vmatprep.subr.mxu0 0.0
  %322 = vmatpush2.msra.mxu0 0.0
  %323 = vmatprep.mubr.f32.mxu0 0.0
  %324 = vmatmul.mubr.f32.gmra.mxu0 %v254
  %v325 = vpop.f32.mrf.mxu0
  %v326 = vadd.f32 0.0, %v325
  %v327 = vpop.f32.mrf.mxu0
  %328 = vmatprep.mubr.f32.mxu0 0.0
  %329 = vmatmul.mubr.f32.gmra.mxu0 %v257
  %v330 = vpop.f32.mrf.mxu0
  %v331 = vadd.f32 0.0, %v330
  %v332 = vpop.f32.mrf.mxu0
  %333 = vdwg.mxu0
  %v334 = vpack.c.bf16 %v331, %v326
  %335 = vrot.lane.b32.xlu0 %v119, 112
  %v336 = vpop.permute.xlu0 %335
  %337 = vrot.lane.b32.xlu0 %v122, 112
  %v338 = vpop.permute.xlu0 %337
  %339 = vrot.lane.b32.xlu0 %v119, 80
  %v340 = vpop.permute.xlu0 %339
  %341 = vrot.lane.b32.xlu0 %v122, 80
  %v342 = vpop.permute.xlu0 %341
  %v343 = vsel %vm137, %v336, 0
  %v345 = vsel %vm137, %v338, 0
  %v347 = vsel %vm137, %v340, 0
  %v349 = vsel %vm137, %v342, 0
  %351 = vmatprep.subr.mxu0 0.0
  %352 = vmatpush1.xpose.msra.mxu0 0.0
  %353 = vmatprep.subr.mxu0 0.0
  %354 = vmatpush1.xpose.msra.mxu0 0.0
  %355 = vmatprep.subr.mxu0 0.0
  %356 = vmatpush1.xpose.msra.mxu0 0.0
  %357 = vmatprep.subr.mxu0 0.0
  %358 = vmatpush1.xpose.msra.mxu0 0.0
  %359 = vmatprep.subr.mxu0 0.0
  %360 = vmatpush1.xpose.msra.mxu0 0.0
  %361 = vmatprep.subr.mxu0 0.0
  %362 = vmatpush1.xpose.msra.mxu0 0.0
  %363 = vmatprep.subr.mxu0 0.0
  %364 = vmatpush1.xpose.msra.mxu0 0.0
  %365 = vmatprep.subr.mxu0 0.0
  %366 = vmatpush1.xpose.msra.mxu0 0.0
  %367 = vmatprep.subr.mxu0 0.0
  %368 = vmatpush1.xpose.msra.mxu0 0.0
  %369 = vmatprep.subr.mxu0 0.0
  %370 = vmatpush1.xpose.msra.mxu0 0.0
  %371 = vmatprep.subr.mxu0 0.0
  %372 = vmatpush1.xpose.msra.mxu0 0.0
  %373 = vmatprep.subr.mxu0 0.0
  %374 = vmatpush1.xpose.msra.mxu0 0.0
  %375 = vmatprep.subr.mxu0 0.0
  %376 = vmatpush1.xpose.msra.mxu0 0.0
  %377 = vmatprep.subr.mxu0 0.0
  %378 = vmatpush1.xpose.msra.mxu0 0.0
  %379 = vmatprep.subr.mxu0 0.0
  %380 = vmatpush1.xpose.msra.mxu0 %v349
  %381 = vmatprep.subr.mxu0 0.0
  %382 = vmatpush1.xpose.msra.mxu0 %v347
  %383 = vmatprep.subr.mxu0 0.0
  %384 = vmatpush2.xpose.msra.mxu0 0.0
  %385 = vmatprep.subr.mxu0 0.0
  %386 = vmatpush2.xpose.msra.mxu0 0.0
  %387 = vmatprep.subr.mxu0 0.0
  %388 = vmatpush2.xpose.msra.mxu0 0.0
  %389 = vmatprep.subr.mxu0 0.0
  %390 = vmatpush2.xpose.msra.mxu0 0.0
  %391 = vmatprep.subr.mxu0 0.0
  %392 = vmatpush2.xpose.msra.mxu0 0.0
  %393 = vmatprep.subr.mxu0 0.0
  %394 = vmatpush2.xpose.msra.mxu0 0.0
  %395 = vmatprep.subr.mxu0 0.0
  %396 = vmatpush2.xpose.msra.mxu0 0.0
  %397 = vmatprep.subr.mxu0 0.0
  %398 = vmatpush2.xpose.msra.mxu0 0.0
  %399 = vmatprep.subr.mxu0 0.0
  %400 = vmatpush2.xpose.msra.mxu0 0.0
  %401 = vmatprep.subr.mxu0 0.0
  %402 = vmatpush2.xpose.msra.mxu0 0.0
  %403 = vmatprep.subr.mxu0 0.0
  %404 = vmatpush2.xpose.msra.mxu0 0.0
  %405 = vmatprep.subr.mxu0 0.0
  %406 = vmatpush2.xpose.msra.mxu0 0.0
  %407 = vmatprep.subr.mxu0 0.0
  %408 = vmatpush2.xpose.msra.mxu0 0.0
  %409 = vmatprep.subr.mxu0 0.0
  %410 = vmatpush2.xpose.msra.mxu0 0.0
  %411 = vmatprep.subr.mxu0 0.0
  %412 = vmatpush2.xpose.msra.mxu0 0.0
  %413 = vmatprep.subr.mxu0 0.0
  %414 = vmatpush2.xpose.msra.mxu0 0.0
  %415 = vmatprep.mubr.f32.mxu0 0.0
  %416 = vmatmul.mubr.f32.gmra.mxu0 %v343
  %v417 = vpop.f32.mrf.mxu0
  %v418 = vadd.f32 0.0, %v417
  %v419 = vpop.f32.mrf.mxu0
  %420 = vmatprep.mubr.f32.mxu0 0.0
  %421 = vmatmul.mubr.f32.gmra.mxu0 %v345
  %v422 = vpop.f32.mrf.mxu0
  %v423 = vadd.f32 0.0, %v422
  %v424 = vpop.f32.mrf.mxu0
  %425 = vdwg.mxu0
  %v426 = vmul.f32 %v418, 0.25
  %v427 = vmul.f32 %v423, 0.25
  %v428 = vadd.f32 %v426, %v125
  %v429 = vadd.f32 %v427, %v126
  %v430 = vsel %vm137, %v428, -inf
  %431 = vmax.xlane.f32.xlu0 %v430
  %v432 = vpop.xlane.xlu0 %431
  %v433 = vsel %vm137, %v429, -inf
  %434 = vmax.xlane.f32.xlu0 %v433
  %v435 = vpop.xlane.xlu0 %434
  %v436 = vsub.f32 %v428, %v432
  %v437 = vsub.f32 %v429, %v435
  %v438 = vmul.f32 %v436, 1.442695
  %v439 = vpow.pop %v438
  %v440 = vmul.f32 %v437, 1.442695
  %v441 = vpow.pop %v440
  %v442 = vsel %vm137, %v439, 0.0
  %443 = vadd.xlane.f32.xlu0 %v442
  %v444 = vpop.xlane.xlu0 %443
  %v445 = vsel %vm137, %v441, 0.0
  %446 = vadd.xlane.f32.xlu0 %v445
  %v447 = vpop.xlane.xlu0 %446
  %v448 = vrcp.pop %v444
  %v449 = vrcp.pop %v447
  %v450 = vmul.f32 %v439, %v448
  %v451 = vmul.f32 %v441, %v449
  %452 = vrot.lane.b32.xlu0 %v119, 48
  %v453 = vpop.permute.xlu0 %452
  %454 = vrot.lane.b32.xlu0 %v122, 48
  %v455 = vpop.permute.xlu0 %454
  %v459 = vsel %vm137, %v450, 0
  %v462 = vsel %vm137, %v451, 0
  %464 = vmatprep.subr.mxu0 0.0
  %465 = vmatpush1.msra.mxu0 0.0
  %466 = vmatprep.subr.mxu0 0.0
  %467 = vmatpush1.msra.mxu0 0.0
  %468 = vmatprep.subr.mxu0 0.0
  %469 = vmatpush1.msra.mxu0 0.0
  %470 = vmatprep.subr.mxu0 0.0
  %471 = vmatpush1.msra.mxu0 0.0
  %472 = vmatprep.subr.mxu0 0.0
  %473 = vmatpush1.msra.mxu0 0.0
  %474 = vmatprep.subr.mxu0 0.0
  %475 = vmatpush1.msra.mxu0 0.0
  %476 = vmatprep.subr.mxu0 0.0
  %477 = vmatpush1.msra.mxu0 0.0
  %478 = vmatprep.subr.mxu0 0.0
  %479 = vmatpush1.msra.mxu0 0.0
  %480 = vmatprep.subr.mxu0 0.0
  %481 = vmatpush1.msra.mxu0 0.0
  %482 = vmatprep.subr.mxu0 0.0
  %483 = vmatpush1.msra.mxu0 0.0
  %484 = vmatprep.subr.mxu0 0.0
  %485 = vmatpush1.msra.mxu0 0.0
  %486 = vmatprep.subr.mxu0 0.0
  %487 = vmatpush1.msra.mxu0 0.0
  %488 = vmatprep.subr.mxu0 0.0
  %489 = vmatpush1.msra.mxu0 0.0
  %490 = vmatprep.subr.mxu0 0.0
  %491 = vmatpush1.msra.mxu0 0.0
  %492 = vmatprep.subr.mxu0 0.0
  %493 = vmatpush1.msra.mxu0 %v455
  %494 = vmatprep.subr.mxu0 0.0
  %495 = vmatpush1.msra.mxu0 %v453
  %496 = vmatprep.subr.mxu0 0.0
  %497 = vmatpush2.msra.mxu0 0.0
  %498 = vmatprep.subr.mxu0 0.0
  %499 = vmatpush2.msra.mxu0 0.0
  %500 = vmatprep.subr.mxu0 0.0
  %501 = vmatpush2.msra.mxu0 0.0
  %502 = vmatprep.subr.mxu0 0.0
  %503 = vmatpush2.msra.mxu0 0.0
  %504 = vmatprep.subr.mxu0 0.0
  %505 = vmatpush2.msra.mxu0 0.0
  %506 = vmatprep.subr.mxu0 0.0
  %507 = vmatpush2.msra.mxu0 0.0
  %508 = vmatprep.subr.mxu0 0.0
  %509 = vmatpush2.msra.mxu0 0.0
  %510 = vmatprep.subr.mxu0 0.0
  %511 = vmatpush2.msra.mxu0 0.0
  %512 = vmatprep.subr.mxu0 0.0
  %513 = vmatpush2.msra.mxu0 0.0
  %514 = vmatprep.subr.mxu0 0.0
  %515 = vmatpush2.msra.mxu0 0.0
  %516 = vmatprep.subr.mxu0 0.0
  %517 = vmatpush2.msra.mxu0 0.0
  %518 = vmatprep.subr.mxu0 0.0
  %519 = vmatpush2.msra.mxu0 0.0
  %520 = vmatprep.subr.mxu0 0.0
  %521 = vmatpush2.msra.mxu0 0.0
  %522 = vmatprep.subr.mxu0 0.0
  %523 = vmatpush2.msra.mxu0 0.0
  %524 = vmatprep.subr.mxu0 0.0
  %525 = vmatpush2.msra.mxu0 0.0
  %526 = vmatprep.subr.mxu0 0.0
  %527 = vmatpush2.msra.mxu0 0.0
  %528 = vmatprep.mubr.f32.mxu0 0.0
  %529 = vmatmul.mubr.f32.gmra.mxu0 %v459
  %v530 = vpop.f32.mrf.mxu0
  %v531 = vadd.f32 0.0, %v530
  %v532 = vpop.f32.mrf.mxu0
  %533 = vmatprep.mubr.f32.mxu0 0.0
  %534 = vmatmul.mubr.f32.gmra.mxu0 %v462
  %v535 = vpop.f32.mrf.mxu0
  %v536 = vadd.f32 0.0, %v535
  %v537 = vpop.f32.mrf.mxu0
  %538 = vdwg.mxu0
  %v539 = vpack.c.bf16 %v536, %v531
  %v542 = vunpack.c.l.b16 %v129
  %v543 = vunpack.c.l.b16 %v130
  %v544 = vpack.c.b16 %v543, %v542
  %v547 = vsel %vm137, %v539, 0
  %549 = vmatprep.subr.bf16.mxu0 0
  %550 = vmatpush1.bf16.msra.mxu0 0
  %551 = vmatprep.subr.bf16.mxu0 0
  %552 = vmatpush1.bf16.msra.mxu0 0
  %553 = vmatprep.subr.bf16.mxu0 0
  %554 = vmatpush1.bf16.msra.mxu0 0
  %555 = vmatprep.subr.bf16.mxu0 0
  %556 = vmatpush1.bf16.msra.mxu0 0
  %557 = vmatprep.subr.bf16.mxu0 0
  %558 = vmatpush1.bf16.msra.mxu0 0
  %559 = vmatprep.subr.bf16.mxu0 0
  %560 = vmatpush1.bf16.msra.mxu0 0
  %561 = vmatprep.subr.bf16.mxu0 0
  %562 = vmatpush1.bf16.msra.mxu0 0
  %563 = vmatprep.subr.bf16.mxu0 0
  %564 = vmatpush1.bf16.msra.mxu0 %v544
  %565 = vmatprep.subr.bf16.mxu0 0
  %566 = vmatpush2.bf16.msra.mxu0 0
  %567 = vmatprep.subr.bf16.mxu0 0
  %568 = vmatpush2.bf16.msra.mxu0 0
  %569 = vmatprep.subr.bf16.mxu0 0
  %570 = vmatpush2.bf16.msra.mxu0 0
  %571 = vmatprep.subr.bf16.mxu0 0
  %572 = vmatpush2.bf16.msra.mxu0 0
  %573 = vmatprep.subr.bf16.mxu0 0
  %574 = vmatpush2.bf16.msra.mxu0 0
  %575 = vmatprep.subr.bf16.mxu0 0
  %576 = vmatpush2.bf16.msra.mxu0 0
  %577 = vmatprep.subr.bf16.mxu0 0
  %578 = vmatpush2.bf16.msra.mxu0 0
  %579 = vmatprep.subr.bf16.mxu0 0
  %580 = vmatpush2.bf16.msra.mxu0 0
  %581 = vmatprep.mubr.bf16.mxu0 0
  %582 = vmatmul.mubr.bf16.gmra.mxu0 %v547
  %v583 = vpop.f32.mrf.mxu0
  %v584 = vadd.f32 0.0, %v583
  %v585 = vpop.f32.mrf.mxu0
  %v586 = vpop.f32.mrf.mxu0
  %v587 = vadd.f32 0.0, %v586
  %v588 = vpop.f32.mrf.mxu0
  %589 = vdwg.mxu0
  %v592 = vunpack.c.l.b16 %v127
  %v593 = vunpack.c.l.b16 %v128
  %v594 = vpack.c.b16 %v593, %v592
  %v597 = vsel %vm137, %v334, 0
  %599 = vmatprep.subr.bf16.mxu0 0
  %600 = vmatpush1.bf16.msra.mxu0 0
  %601 = vmatprep.subr.bf16.mxu0 0
  %602 = vmatpush1.bf16.msra.mxu0 0
  %603 = vmatprep.subr.bf16.mxu0 0
  %604 = vmatpush1.bf16.msra.mxu0 0
  %605 = vmatprep.subr.bf16.mxu0 0
  %606 = vmatpush1.bf16.msra.mxu0 0
  %607 = vmatprep.subr.bf16.mxu0 0
  %608 = vmatpush1.bf16.msra.mxu0 0
  %609 = vmatprep.subr.bf16.mxu0 0
  %610 = vmatpush1.bf16.msra.mxu0 0
  %611 = vmatprep.subr.bf16.mxu0 0
  %612 = vmatpush1.bf16.msra.mxu0 0
  %613 = vmatprep.subr.bf16.mxu0 0
  %614 = vmatpush1.bf16.msra.mxu0 %v594
  %615 = vmatprep.subr.bf16.mxu0 0
  %616 = vmatpush2.bf16.msra.mxu0 0
  %617 = vmatprep.subr.bf16.mxu0 0
  %618 = vmatpush2.bf16.msra.mxu0 0
  %619 = vmatprep.subr.bf16.mxu0 0
  %620 = vmatpush2.bf16.msra.mxu0 0
  %621 = vmatprep.subr.bf16.mxu0 0
  %622 = vmatpush2.bf16.msra.mxu0 0
  %623 = vmatprep.subr.bf16.mxu0 0
  %624 = vmatpush2.bf16.msra.mxu0 0
  %625 = vmatprep.subr.bf16.mxu0 0
  %626 = vmatpush2.bf16.msra.mxu0 0
  %627 = vmatprep.subr.bf16.mxu0 0
  %628 = vmatpush2.bf16.msra.mxu0 0
  %629 = vmatprep.subr.bf16.mxu0 0
  %630 = vmatpush2.bf16.msra.mxu0 0
  %631 = vmatprep.mubr.bf16.mxu0 0
  %632 = vmatmul.mubr.bf16.gmra.mxu0 %v597
  %v633 = vpop.f32.mrf.mxu0
  %v634 = vadd.f32 %v584, %v633
  %v635 = vpop.f32.mrf.mxu0
  %v636 = vpop.f32.mrf.mxu0
  %v637 = vadd.f32 %v587, %v636
  %v638 = vpop.f32.mrf.mxu0
  %639 = vdwg.mxu0
  %v640 = vld [vmem:[%s5] sm:$0x1]
  %v642 = vlaneseq
  %v643 = vshrl.u32 %v642, 7
  %v644 = vsub.s32 0, %v643
  %v645 = vrot.slane %v640, %v644
  %v647 = vadd.f32 %v634, %v645
  %v648 = vadd.f32 %v637, %v645
  %v649 = vadd.f32 %v54, %v647
  %v650 = vadd.f32 %v55, %v648
  %v651 = vsel %vm80, %v649, 0.0
  %652 = vadd.xlane.f32.xlu0 %v651
  %v653 = vpop.xlane.xlu0 %652
  %v654 = vsel %vm80, %v650, 0.0
  %655 = vadd.xlane.f32.xlu0 %v654
  %v656 = vpop.xlane.xlu0 %655
  %v657 = vrcp.pop 32.0
  %v658 = vmul.f32 %v653, %v657
  %v659 = vmul.f32 %v656, %v657
  %v660 = vsub.f32 %v649, %v658
  %v661 = vsub.f32 %v650, %v659
  %v662 = vmul.f32 %v660, %v660
  %v663 = vmul.f32 %v661, %v661
  %v664 = vsel %vm80, %v662, 0.0
  %665 = vadd.xlane.f32.xlu0 %v664
  %v666 = vpop.xlane.xlu0 %665
  %v667 = vsel %vm80, %v663, 0.0
  %668 = vadd.xlane.f32.xlu0 %v667
  %v669 = vpop.xlane.xlu0 %668
  %v670 = vmul.f32 %v666, %v657
  %v671 = vmul.f32 %v669, %v657
  %v672 = vadd.f32 %v670, 1e-05
  %v673 = vadd.f32 %v671, 1e-05
  %v674 = vrsqrt.pop %v672
  %v675 = vrsqrt.pop %v673
  %v676 = vmul.f32 %v660, %v674
  %v677 = vmul.f32 %v661, %v675
  %v678 = vld [vmem:[%s6] sm:$0x1]
  %v680 = vlaneseq
  %v681 = vshrl.u32 %v680, 7
  %v682 = vsub.s32 0, %v681
  %v683 = vrot.slane %v678, %v682
  %v685 = vmul.f32 %v676, %v683
  %v686 = vmul.f32 %v677, %v683
  %v687 = vld [vmem:[%s7] sm:$0x1]
  %v689 = vlaneseq
  %v690 = vshrl.u32 %v689, 7
  %v691 = vsub.s32 0, %v690
  %v692 = vrot.slane %v687, %v691
  %v694 = vadd.f32 %v685, %v692
  %v695 = vadd.f32 %v686, %v692
  %v696 = vpack.c.bf16 %v695, %v694
  %v697 = vld [vmem:[%s8] sm:$0xf]
  %v698 = vld [vmem:[%s8 + $0x4] sm:$0xf]
  %v699 = vld [vmem:[%s8 + $0x8] sm:$0xf]
  %v700 = vld [vmem:[%s8 + $0xc] sm:$0xf]
  %v701 = vld [vmem:[%s9] sm:$0x1]
  %v703 = vlaneseq
  %v704 = vshrl.u32 %v703, 7
  %v705 = vsub.s32 0, %v704
  %v706 = vrot.slane %v701, %v705
  %v712 = vunpack.c.l.b16 %v697
  %v713 = vunpack.c.l.b16 %v698
  %v714 = vunpack.c.l.b16 %v699
  %v715 = vunpack.c.l.b16 %v700
  %v716 = vpack.c.b16 %v713, %v712
  %v717 = vpack.c.b16 %v715, %v714
  %v721 = vsel %vm80, %v696, 0
  %723 = vmatprep.subr.bf16.mxu0 0
  %724 = vmatpush1.bf16.msra.mxu0 0
  %725 = vmatprep.subr.bf16.mxu0 0
  %726 = vmatpush1.bf16.msra.mxu0 0
  %727 = vmatprep.subr.bf16.mxu0 0
  %728 = vmatpush1.bf16.msra.mxu0 0
  %729 = vmatprep.subr.bf16.mxu0 0
  %730 = vmatpush1.bf16.msra.mxu0 0
  %731 = vmatprep.subr.bf16.mxu0 0
  %732 = vmatpush1.bf16.msra.mxu0 0
  %733 = vmatprep.subr.bf16.mxu0 0
  %734 = vmatpush1.bf16.msra.mxu0 0
  %735 = vmatprep.subr.bf16.mxu0 0
  %736 = vmatpush1.bf16.msra.mxu0 %v717
  %737 = vmatprep.subr.bf16.mxu0 0
  %738 = vmatpush1.bf16.msra.mxu0 %v716
  %739 = vmatprep.subr.bf16.mxu0 0
  %740 = vmatpush2.bf16.msra.mxu0 0
  %741 = vmatprep.subr.bf16.mxu0 0
  %742 = vmatpush2.bf16.msra.mxu0 0
  %743 = vmatprep.subr.bf16.mxu0 0
  %744 = vmatpush2.bf16.msra.mxu0 0
  %745 = vmatprep.subr.bf16.mxu0 0
  %746 = vmatpush2.bf16.msra.mxu0 0
  %747 = vmatprep.subr.bf16.mxu0 0
  %748 = vmatpush2.bf16.msra.mxu0 0
  %749 = vmatprep.subr.bf16.mxu0 0
  %750 = vmatpush2.bf16.msra.mxu0 0
  %751 = vmatprep.subr.bf16.mxu0 0
  %752 = vmatpush2.bf16.msra.mxu0 0
  %753 = vmatprep.subr.bf16.mxu0 0
  %754 = vmatpush2.bf16.msra.mxu0 0
  %755 = vmatprep.mubr.bf16.mxu0 0
  %756 = vmatmul.mubr.bf16.gmra.mxu0 %v721
  %v757 = vpop.f32.mrf.mxu0
  %v758 = vadd.f32 %v706, %v757
  %v759 = vpop.f32.mrf.mxu0
  %v760 = vpop.f32.mrf.mxu0
  %v761 = vadd.f32 %v706, %v760
  %v762 = vpop.f32.mrf.mxu0
  %763 = vdwg.mxu0
  %v764 = vmul.f32 %v758, %v758
  %v765 = vmul.f32 %v761, %v761
  %v766 = vmul.f32 %v758, %v764
  %v767 = vmul.f32 %v761, %v765
  %v768 = vmul.f32 %v766, 0.044715
  %v769 = vmul.f32 %v767, 0.044715
  %v770 = vadd.f32 %v758, %v768
  %v771 = vadd.f32 %v761, %v769
  %v772 = vmul.f32 %v770, 0.7978846
  %v773 = vmul.f32 %v771, 0.7978846
  %v774 = vtanh.pop %v772
  %v775 = vtanh.pop %v773
  %v776 = vadd.f32 %v774, 1.0
  %v777 = vadd.f32 %v775, 1.0
  %v778 = vmul.f32 %v776, 0.5
  %v779 = vmul.f32 %v777, 0.5
  %v780 = vmul.f32 %v758, %v778
  %v781 = vmul.f32 %v761, %v779
  %v782 = vpack.c.bf16 %v781, %v780
  %v783 = vld [vmem:[%s10] sm:$0xf]
  %v784 = vld [vmem:[%s10 + $0x4] sm:$0xf]
  %v785 = vld [vmem:[%s10 + $0x8] sm:$0xf]
  %v786 = vld [vmem:[%s10 + $0xc] sm:$0xf]
  %v787 = vld [vmem:[%s10 + $0x10] sm:$0xf]
  %v788 = vld [vmem:[%s10 + $0x14] sm:$0xf]
  %v789 = vld [vmem:[%s10 + $0x18] sm:$0xf]
  %v790 = vld [vmem:[%s10 + $0x1c] sm:$0xf]
  %v791 = vld [vmem:[%s11] sm:$0x1]
  %v793 = vlaneseq
  %v794 = vshrl.u32 %v793, 7
  %v795 = vsub.s32 0, %v794
  %v796 = vrot.slane %v791, %v795
  %v806 = vunpack.c.l.b16 %v783
  %v807 = vunpack.c.l.b16 %v784
  %v808 = vunpack.c.l.b16 %v785
  %v809 = vunpack.c.l.b16 %v786
  %v810 = vunpack.c.l.b16 %v787
  %v811 = vunpack.c.l.b16 %v788
  %v812 = vunpack.c.l.b16 %v789
  %v813 = vunpack.c.l.b16 %v790
  %v814 = vpack.c.b16 %v807, %v806
  %v815 = vpack.c.b16 %v809, %v808
  %v816 = vpack.c.b16 %v811, %v810
  %v817 = vpack.c.b16 %v813, %v812
  %vm822 = vcmask 523264
  %v824 = vsel %vm822, %v782, 0
  %826 = vmatprep.subr.bf16.mxu0 0
  %827 = vmatpush1.bf16.msra.mxu0 0
  %828 = vmatprep.subr.bf16.mxu0 0
  %829 = vmatpush1.bf16.msra.mxu0 0
  %830 = vmatprep.subr.bf16.mxu0 0
  %831 = vmatpush1.bf16.msra.mxu0 0
  %832 = vmatprep.subr.bf16.mxu0 0
  %833 = vmatpush1.bf16.msra.mxu0 0
  %834 = vmatprep.subr.bf16.mxu0 0
  %835 = vmatpush1.bf16.msra.mxu0 %v817
  %836 = vmatprep.subr.bf16.mxu0 0
  %837 = vmatpush1.bf16.msra.mxu0 %v816
  %838 = vmatprep.subr.bf16.mxu0 0
  %839 = vmatpush1.bf16.msra.mxu0 %v815
  %840 = vmatprep.subr.bf16.mxu0 0
  %841 = vmatpush1.bf16.msra.mxu0 %v814
  %842 = vmatprep.subr.bf16.mxu0 0
  %843 = vmatpush2.bf16.msra.mxu0 0
  %844 = vmatprep.subr.bf16.mxu0 0
  %845 = vmatpush2.bf16.msra.mxu0 0
  %846 = vmatprep.subr.bf16.mxu0 0
  %847 = vmatpush2.bf16.msra.mxu0 0
  %848 = vmatprep.subr.bf16.mxu0 0
  %849 = vmatpush2.bf16.msra.mxu0 0
  %850 = vmatprep.subr.bf16.mxu0 0
  %851 = vmatpush2.bf16.msra.mxu0 0
  %852 = vmatprep.subr.bf16.mxu0 0
  %853 = vmatpush2.bf16.msra.mxu0 0
  %854 = vmatprep.subr.bf16.mxu0 0
  %855 = vmatpush2.bf16.msra.mxu0 0
  %856 = vmatprep.subr.bf16.mxu0 0
  %857 = vmatpush2.bf16.msra.mxu0 0
  %858 = vmatprep.mubr.bf16.mxu0 0
  %859 = vmatmul.mubr.bf16.gmra.mxu0 %v824
  %v860 = vpop.f32.mrf.mxu0
  %v861 = vadd.f32 %v796, %v860
  %v862 = vpop.f32.mrf.mxu0
  %v863 = vpop.f32.mrf.mxu0
  %v864 = vadd.f32 %v796, %v863
  %v865 = vpop.f32.mrf.mxu0
  %866 = vdwg.mxu0
  %v867 = vadd.f32 %v694, %v861
  %v868 = vadd.f32 %v695, %v864
  %v869 = vsel %vm80, %v867, 0.0
  %870 = vadd.xlane.f32.xlu0 %v869
  %v871 = vpop.xlane.xlu0 %870
  %v872 = vsel %vm80, %v868, 0.0
  %873 = vadd.xlane.f32.xlu0 %v872
  %v874 = vpop.xlane.xlu0 %873
  %v875 = vmul.f32 %v871, %v657
  %v876 = vmul.f32 %v874, %v657
  %v877 = vsub.f32 %v867, %v875
  %v878 = vsub.f32 %v868, %v876
  %v879 = vmul.f32 %v877, %v877
  %v880 = vmul.f32 %v878, %v878
  %v881 = vsel %vm80, %v879, 0.0
  %882 = vadd.xlane.f32.xlu0 %v881
  %v883 = vpop.xlane.xlu0 %882
  %v884 = vsel %vm80, %v880, 0.0
  %885 = vadd.xlane.f32.xlu0 %v884
  %v886 = vpop.xlane.xlu0 %885
  %v887 = vmul.f32 %v883, %v657
  %v888 = vmul.f32 %v886, %v657
  %v889 = vadd.f32 %v887, 1e-05
  %v890 = vadd.f32 %v888, 1e-05
  %v891 = vrsqrt.pop %v889
  %v892 = vrsqrt.pop %v890
  %v893 = vmul.f32 %v877, %v891
  %v894 = vmul.f32 %v878, %v892
  %v895 = vld [vmem:[%s12] sm:$0x1]
  %v897 = vlaneseq
  %v898 = vshrl.u32 %v897, 7
  %v899 = vsub.s32 0, %v898
  %v900 = vrot.slane %v895, %v899
  %v902 = vmul.f32 %v893, %v900
  %v903 = vmul.f32 %v894, %v900
  %v904 = vld [vmem:[%s13] sm:$0x1]
  %v906 = vlaneseq
  %v907 = vshrl.u32 %v906, 7
  %v908 = vsub.s32 0, %v907
  %v909 = vrot.slane %v904, %v908
  %v911 = vadd.f32 %v902, %v909
  %v912 = vadd.f32 %v903, %v909
  %v914 = vrot.slane %v912, 7
  %vm916 = vcmask 1040384
  %v917 = vsel %vm916, %v911, %v914
  %v918 = vpack.c.bf16 %v917, %v917
  %v919 = vld [vmem:[%s14] sm:$0xf]
  %v920 = vld [vmem:[%s14 + $0x4] sm:$0xf]
  %v921 = vld [vmem:[%s14 + $0x8] sm:$0xf]
  %v922 = vld [vmem:[%s14 + $0xc] sm:$0xf]
  %v923 = vld [vmem:[%s15] sm:$0x1]
  %v925 = vlaneseq
  %v926 = vshrl.u32 %v925, 7
  %v927 = vsub.s32 0, %v926
  %v928 = vrot.slane %v923, %v927
  %v934 = vunpack.c.l.b16 %v919
  %v935 = vunpack.c.l.b16 %v920
  %v936 = vunpack.c.l.b16 %v921
  %v937 = vunpack.c.l.b16 %v922
  %v938 = vpack.c.b16 %v935, %v934
  %v939 = vpack.c.b16 %v937, %v936
  %v943 = vsel %vm80, %v918, 0
  %945 = vmatprep.subr.bf16.mxu0 0
  %946 = vmatpush1.bf16.msra.mxu0 0
  %947 = vmatprep.subr.bf16.mxu0 0
  %948 = vmatpush1.bf16.msra.mxu0 0
  %949 = vmatprep.subr.bf16.mxu0 0
  %950 = vmatpush1.bf16.msra.mxu0 0
  %951 = vmatprep.subr.bf16.mxu0 0
  %952 = vmatpush1.bf16.msra.mxu0 0
  %953 = vmatprep.subr.bf16.mxu0 0
  %954 = vmatpush1.bf16.msra.mxu0 0
  %955 = vmatprep.subr.bf16.mxu0 0
  %956 = vmatpush1.bf16.msra.mxu0 0
  %957 = vmatprep.subr.bf16.mxu0 0
  %958 = vmatpush1.bf16.msra.mxu0 %v939
  %959 = vmatprep.subr.bf16.mxu0 0
  %960 = vmatpush1.bf16.msra.mxu0 %v938
  %961 = vmatprep.subr.bf16.mxu0 0
  %962 = vmatpush2.bf16.msra.mxu0 0
  %963 = vmatprep.subr.bf16.mxu0 0
  %964 = vmatpush2.bf16.msra.mxu0 0
  %965 = vmatprep.subr.bf16.mxu0 0
  %966 = vmatpush2.bf16.msra.mxu0 0
  %967 = vmatprep.subr.bf16.mxu0 0
  %968 = vmatpush2.bf16.msra.mxu0 0
  %969 = vmatprep.subr.bf16.mxu0 0
  %970 = vmatpush2.bf16.msra.mxu0 0
  %971 = vmatprep.subr.bf16.mxu0 0
  %972 = vmatpush2.bf16.msra.mxu0 0
  %973 = vmatprep.subr.bf16.mxu0 0
  %974 = vmatpush2.bf16.msra.mxu0 0
  %975 = vmatprep.subr.bf16.mxu0 0
  %976 = vmatpush2.bf16.msra.mxu0 0
  %977 = vmatprep.mubr.bf16.mxu0 0
  %978 = vmatmul.mubr.bf16.gmra.mxu0 %v943
  %v979 = vpop.f32.mrf.mxu0
  %v980 = vadd.f32 %v928, %v979
  %v981 = vpop.f32.mrf.mxu0
  %v982 = vpop.f32.mrf.mxu0
  %v983 = vpop.f32.mrf.mxu0
  %984 = vdwg.mxu0
  %vm985 = vcmask 91136
  %986 = vst.msk [vmem:[%s16] sm:$0x3] %vm985, %v980
  // Predicated region
  $region66: #{emotion_classifier_forward.1} parent=0 // pred_check
    _
  $region67: #{emotion_classifier_forward.1} parent=0 // pred_check_branch
    %988 = sbr.rel (0) target = $region69
  $region68: #{emotion_classifier_forward.1} parent=0 // pred_region
    _
  $region69: #{emotion_classifier_forward.1} parent=0 // pred_fallthru
    _
  // Predicated region
  $region70: #{emotion_classifier_forward.1} parent=0 // pred_check
    _
  $region71: #{emotion_classifier_forward.1} parent=0 // pred_check_branch
    %990 = sbr.rel (0) target = $region73
  $region72: #{emotion_classifier_forward.1} parent=0 // pred_region
    _
  $region73: #{emotion_classifier_forward.1} parent=0 // pred_fallthru
    _

</llo_original>
